<compile_context>
chip_gen: v7x
topology: tpu7x:2x2x1
jax: 0.10.0
libtpu: 0.0.40
codegen_flags: <defaults>
</compile_context>

<pallas_src>
import numpy as np
import jax
import jax.numpy as jnp
from jax.experimental import pallas as pl
from jax.experimental.pallas import tpu as pltpu


# ---------------------------------------------------------------------------
# Pallas kernel: pupil = ampli * (cos(phase) + 1j*sin(phase)), split re/im.
# ---------------------------------------------------------------------------
def _pupil_kernel(ampli_ref, phase_ref, re_ref, im_ref):
    a = ampli_ref[...]
    ph = phase_ref[...]
    # exp(1j*ph) = cos(ph) + 1j*sin(ph)   (EUP transcendentals, VPU multiply)
    re_ref[...] = a * jnp.cos(ph)
    im_ref[...] = a * jnp.sin(ph)


def pupil_estimate_forward(pupil_ampli, pupil_phase):
    """PupilEstimate_layer.forward() -> complex64 pupil of shape (hei, wid)."""
    hei, wid = pupil_ampli.shape
    vmem = lambda: pl.BlockSpec(memory_space=pltpu.MemorySpace.VMEM)
    re, im = pl.pallas_call(
        _pupil_kernel,
        out_shape=(jax.ShapeDtypeStruct((hei, wid), jnp.float32),
                   jax.ShapeDtypeStruct((hei, wid), jnp.float32)),
        in_specs=[vmem(), vmem()],
        out_specs=(vmem(), vmem()),
    )(pupil_ampli.astype(jnp.float32), pupil_phase.astype(jnp.float32))
    # TODO(synk): Mosaic kernels have no complex dtype; the complex64 result is
    # assembled here in the wrapper from the two in-kernel f32 planes.
    return jax.lax.complex(re, im)


# ---------------------------------------------------------------------------
if __name__ == "__main__":
    hei = wid = 16
    n_zernike = 15

    # Zernike mode 0: circular pupil aperture, as in the FPM setup that feeds
    # this module (numpy, static, built once).
    y = np.arange(-np.fix(wid / 2), np.ceil(wid / 2))
    x = np.arange(-np.fix(hei / 2), np.ceil(hei / 2))
    xx, yy = np.meshgrid(x, y)
    radius = np.sqrt(xx * xx + yy * yy)
    aperture = (radius <= 5.0).astype(np.float32)

    key = jax.random.PRNGKey(0)
    k1, k2 = jax.random.split(key)
    zernike_pupils = jnp.concatenate(
        [jnp.asarray(aperture)[None],
         jax.random.normal(k1, (n_zernike - 1, hei, wid), jnp.float32)
         * jnp.asarray(aperture)[None]],
        axis=0)

    # Module buffers/parameters:
    #   pupil_ampli = zernike_pupils[0]  (fixed amplitude)
    #   pupil_phase = nn.Parameter(zeros) -> use small random values here so
    #   the cos/sin path is actually exercised by the test.
    pupil_ampli = zernike_pupils[0]
    pupil_phase = 0.1 * jax.random.normal(k2, (hei, wid), jnp.float32)

    out = jax.block_until_ready(pupil_estimate_forward(pupil_ampli, pupil_phase))
    ref = jax.block_until_ready(pupil_ampli * jnp.exp(1j * pupil_phase))

    np.testing.assert_allclose(np.asarray(out), np.asarray(ref),
                               rtol=1e-4, atol=1e-4)
    print("KERNEL_OK")
</pallas_src>

<mosaic_0001>
module attributes {stable_mosaic.version = 11 : i64} {
  func.func @_pupil_kernel(%arg0: memref<16x16xf32, #tpu.memory_space<vmem>>, %arg1: memref<16x16xf32, #tpu.memory_space<vmem>>, %arg2: memref<16x16xf32, #tpu.memory_space<vmem>>, %arg3: memref<16x16xf32, #tpu.memory_space<vmem>>) attributes {dimension_semantics = [], scalar_prefetch = 0 : i64, scratch_operands = 0 : i64, tpu.core_type = #tpu.core_type<tc>} {
    %c0 = arith.constant 0 : index
    %c0_0 = arith.constant 0 : index
    %0 = vector.load %arg0[%c0, %c0_0] : memref<16x16xf32, #tpu.memory_space<vmem>>, vector<16x16xf32>
    %c0_1 = arith.constant 0 : index
    %c0_2 = arith.constant 0 : index
    %1 = vector.load %arg1[%c0_1, %c0_2] : memref<16x16xf32, #tpu.memory_space<vmem>>, vector<16x16xf32>
    %2 = math.cos %1 : vector<16x16xf32>
    %3 = arith.mulf %0, %2 : vector<16x16xf32>
    %c0_3 = arith.constant 0 : index
    %c0_4 = arith.constant 0 : index
    %4 = vector.load %arg2[%c0_3, %c0_4] : memref<16x16xf32, #tpu.memory_space<vmem>>, vector<16x16xf32>
    tpu.vector_store %arg2[%c0_3, %c0_4], %3 {strides = array<i32>} : memref<16x16xf32, #tpu.memory_space<vmem>>, vector<16x16xf32>,
    %5 = math.sin %1 : vector<16x16xf32>
    %6 = arith.mulf %0, %5 : vector<16x16xf32>
    %c0_5 = arith.constant 0 : index
    %c0_6 = arith.constant 0 : index
    %7 = vector.load %arg3[%c0_5, %c0_6] : memref<16x16xf32, #tpu.memory_space<vmem>>, vector<16x16xf32>
    tpu.vector_store %arg3[%c0_5, %c0_6], %6 {strides = array<i32>} : memref<16x16xf32, #tpu.memory_space<vmem>>, vector<16x16xf32>,
    return
  }
}

</mosaic_0001>

<llo_original>
// kernel: tpu_custom_call.1
$region0: #{tpu_custom_call.1}
  #allocation0 [shape = 'u32[]', space=smem, size = 0x4, offset = 0x4, fixed_abs, tag = 'smem constant byte address 0x4 - core index']
  #allocation1 [shape = 'u32[144,128]{1,0:T(1,128)}', space=vmem, size = 0x12000, scoped, tag = 'internal scratch']
  %s0 = inlined_call_operand.hbm [shape: f32[16,16], index: 0, kind: input, shape index: {}]
  %s1 = inlined_call_operand.hbm [shape: f32[16,16], index: 1, kind: input, shape index: {}]
  %s2 = inlined_call_operand.hbm [shape: f32[16,16], index: 2, kind: output, shape index: {0}]
  %s3 = inlined_call_operand.hbm [shape: f32[16,16], index: 3, kind: output, shape index: {1}]
  %4 = xla_tuple %s2, %s3
  %s5 = sld [smem:[#allocation0]]
  $region34: #{tpu_custom_call.1} parent=0
    _
  %s7 = ssub.s32 1, %s5
  %s8 = scalar_select 0, %s7, %s5
  $region1: #{tpu_custom_call.1} parent=0
    #allocation2 [shape = 'u8[8192]{0}', space=vmem, size = 0x2000, scoped, tag = 'input window, operand 0, single buffered']
    #allocation3 [shape = 's32[1]{0}', space=sflag, size = 0x4, scoped, tag = 'scoped memory for tpu_custom_call.1']
    #allocation4 [shape = 's32[1]{0}', space=sflag, size = 0x4, scoped, tag = 'scoped memory for tpu_custom_call.1']
    #allocation5 [shape = 'u8[8192]{0}', space=vmem, size = 0x2000, scoped, tag = 'input window, operand 1, single buffered']
    #allocation6 [shape = 's32[1]{0}', space=sflag, size = 0x4, scoped, tag = 'scoped memory for tpu_custom_call.1']
    #allocation7 [shape = 'u8[8192]{0}', space=vmem, size = 0x2000, scoped, tag = 'output window, operand 0, single buffered']
    #allocation8 [shape = 'u8[8192]{0}', space=vmem, size = 0x2000, scoped, tag = 'output window, operand 1, single buffered']
    #allocation9 [shape = 's32[1]{0}', space=sflag, size = 0x4, scoped, tag = 'scoped memory for tpu_custom_call.1']
    %9 = vsyncpa [#allocation3], 0
    %10 = vsyncpa [#allocation6], 0
    %11 = vsyncpa [#allocation4], 0
    %12 = vsyncpa [#allocation9], 0
    // Predicated region
    $region2: #{tpu_custom_call.1} parent=1 // pred_check
      _
    $region3: #{tpu_custom_call.1} parent=1 // pred_check_branch
      %14 = sbr.rel (0) target = $region5
    $region4: #{tpu_custom_call.1} parent=1 // pred_region
      %s16 = ssub.s32 256, 256
      %17 = vsyncadd [#allocation3], %s16
      %s18 = sshll.u32 [#allocation2], 4
      %s19 = int_to_ptr.vmem [resolvable:$true] %s18
      %24 = dma.hbm_to_vmem [thread:$0]  %s0, 256, %s19, [#allocation3], 128, 128, 8
    $region5: #{tpu_custom_call.1} parent=1 // pred_fallthru
      _
    // Predicated region
    $region6: #{tpu_custom_call.1} parent=1 // pred_check
      _
    $region7: #{tpu_custom_call.1} parent=1 // pred_check_branch
      %26 = sbr.rel (0) target = $region9
    $region8: #{tpu_custom_call.1} parent=1 // pred_region
      %s28 = ssub.s32 256, 256
      %29 = vsyncadd [#allocation6], %s28
      %s30 = sshll.u32 [#allocation5], 4
      %s31 = int_to_ptr.vmem [resolvable:$true] %s30
      %36 = dma.hbm_to_vmem [thread:$0]  %s1, 256, %s31, [#allocation6], 128, 128, 8
    $region9: #{tpu_custom_call.1} parent=1 // pred_fallthru
      _
    // Predicated region
    $region10: #{tpu_custom_call.1} parent=1 // pred_check
      _
    $region11: #{tpu_custom_call.1} parent=1 // pred_check_branch
      %38 = sbr.rel (0) target = $region13
    $region12: #{tpu_custom_call.1} parent=1 // pred_region
      %39 = dma.done [#allocation3], 256
    $region13: #{tpu_custom_call.1} parent=1 // pred_fallthru
      _
    // Predicated region
    $region14: #{tpu_custom_call.1} parent=1 // pred_check
      _
    $region15: #{tpu_custom_call.1} parent=1 // pred_check_branch
      %41 = sbr.rel (0) target = $region17
    $region16: #{tpu_custom_call.1} parent=1 // pred_region
      %42 = dma.done [#allocation6], 256
    $region17: #{tpu_custom_call.1} parent=1 // pred_fallthru
      _
    %v43 = vld [vmem:[#allocation2] sm:$0xff]
    %v44 = vld [vmem:[#allocation2 + $0x8] sm:$0xff]
    %v45 = vld [vmem:[#allocation5] sm:$0xff]
    %v46 = vld [vmem:[#allocation5 + $0x8] sm:$0xff]
    %v47 = vand.u32 2147483647, %v45
    %vm48 = vcmp.le.f32.partialorder %v47, 0.7853982
    %vm49 = vcmp.lt.s32.totalorder %v45, 0
    %v50 = vand.u32 %v45, 2139095040
    %v51 = vshrl.u32 %v50, 23
    %v52 = vsub.s32 %v51, 127
    %v53 = vand.u32 2147483647, %v45
    %v54 = vand.u32 %v53, 8388607
    %v55 = vor.u32 %v54, 8388608
    %v56 = vsub.s32 0, %v55
    %v57 = vadd.s32 %v52, 1
    %vm58 = vcmp.gt.s32.totalorder %v57, 0
    %v59 = vsel %vm58, %v57, 0
    %v60 = vshrl.u32 %v59, 5
    %v61 = vand.u32 %v59, 31
    %v62 = vsub.s32 32, %v61
    %v63 = vshrl.u32 683565275, %v62
    %v64 = vshll.u32 683565275, %v61
    %v65 = vshrl.u32 2475754826, %v62
    %v66 = vor.u32 %v64, %v65
    %v67 = vshll.u32 2475754826, %v61
    %v68 = vshrl.u32 2131351028, %v62
    %v69 = vor.u32 %v67, %v68
    %v70 = vshll.u32 2131351028, %v61
    %v71 = vshrl.u32 2102212464, %v62
    %v72 = vor.u32 %v70, %v71
    %v73 = vshll.u32 2102212464, %v61
    %v74 = vshrl.u32 920167782, %v62
    %v75 = vor.u32 %v73, %v74
    %v76 = vshll.u32 920167782, %v61
    %v77 = vshrl.u32 1326507024, %v62
    %v78 = vor.u32 %v76, %v77
    %vm79 = vcmp.lt.s32.totalorder %v60, 1
    %vm80 = vcmp.lt.s32.totalorder %v60, 2
    %vm81 = vcmp.lt.s32.totalorder %v60, 3
    %vm82 = vcmp.lt.s32.totalorder %v60, 4
    %v83 = vsel %vm79, %v63, %v66
    %v84 = vsel %vm82, %v72, 2102212464
    %v85 = vsel %vm81, %v69, %v84
    %v86 = vsel %vm80, %v83, %v85
    %v87 = vsel %vm79, %v66, %v69
    %v88 = vsel %vm82, %v75, 920167782
    %v89 = vsel %vm81, %v72, %v88
    %v90 = vsel %vm80, %v87, %v89
    %v91 = vsel %vm79, %v69, %v72
    %v92 = vsel %vm82, %v78, 1326507024
    %v93 = vsel %vm81, %v75, %v92
    %v94 = vsel %vm80, %v91, %v93
    %v95 = vshll.u32 %v55, 8
    %v96 = vmul.u32.u64.compose %v95, %v94
    %v97 = vextract.low.u32 %v96
    %v98 = vextract.high.u32 %v96
    %v99 = vmul.u32.u64.compose %v95, %v90
    %v100 = vextract.low.u32 %v99
    %v101 = vextract.high.u32 %v99
    %v102 = vmul.u32 %v95, %v86
    %v103 = vadd.s32 %v98, %v100
    %vm104 = vc.u32 %v98, %v100
    %v105 = vadd.s32 %v101, 1
    %v106 = vsel %vm104, %v105, %v101
    %v107 = vadd.s32 %v102, %v106
    %v108 = vadd.s32 %v107, 536870912
    %v109 = vshrl.u32 %v108, 30
    %v110 = vshll.u32 %v109, 30
    %v111 = vsub.s32 %v107, %v110
    %vm112 = vcmp.lt.s32.totalorder %v111, 0
    %v113 = vsub.s32 0, %v111
    %v114 = vsel %vm112, %v113, %v111
    %v115 = vclz %v114
    %v116 = vsub.s32 %v115, 2
    %vm117 = vcmp.gt.s32.totalorder 0, %v116
    %v118 = vsel %vm117, 0, %v116
    %v119 = vsub.s32 32, %v118
    %v120 = vshll.u32 %v111, %v118
    %v121 = vshrl.u32 %v103, %v119
    %v122 = vor.u32 %v120, %v121
    %v123 = vsub.s32 4294967266, %v118
    %v124 = vadd.s32 %v123, 127
    %v125 = vshll.u32 %v124, 23
    %v126 = vor.u32 4788187, %v125
    %v127 = vand.u32 2147483647, %v126
    %v129 = vcvt.s32.f32 %v122
    %v130 = vmul.f32 %v129, %v127
    %v131 = vxor.u32 %v130, 2147483648
    %v132 = vsel %vm49, %v131, %v130
    %v133 = vsub.s32 4, %v109
    %v134 = vsel %vm49, %v133, %v109
    %v135 = vsel %vm48, %v45, %v132
    %v136 = vsel %vm48, 0, %v134
    %v137 = vcosq.f32.pop %v135
    %v138 = vsinq.f32.pop %v135
    %vm139 = vweird.f32 %v45
    %v140 = vand.u32 %v136, 3
    %vm141 = vcmp.lt.s32.totalorder %v140, 2
    %vm142 = vcmp.eq.s32.totalorder %v140, 0
    %v143 = vxor.u32 %v138, 2147483648
    %v144 = vsel %vm142, %v137, %v143
    %vm145 = vcmp.eq.s32.totalorder %v140, 2
    %v146 = vxor.u32 %v137, 2147483648
    %v147 = vsel %vm145, %v146, %v138
    %v148 = vsel %vm141, %v144, %v147
    %v149 = vsel %vm139, nan, %v148
    %v150 = vand.u32 2147483647, %v46
    %vm151 = vcmp.le.f32.partialorder %v150, 0.7853982
    %vm152 = vcmp.lt.s32.totalorder %v46, 0
    %v153 = vand.u32 %v46, 2139095040
    %v154 = vshrl.u32 %v153, 23
    %v155 = vsub.s32 %v154, 127
    %v156 = vand.u32 2147483647, %v46
    %v157 = vand.u32 %v156, 8388607
    %v158 = vor.u32 %v157, 8388608
    %v159 = vsub.s32 0, %v158
    %v160 = vadd.s32 %v155, 1
    %vm161 = vcmp.gt.s32.totalorder %v160, 0
    %v162 = vsel %vm161, %v160, 0
    %v163 = vshrl.u32 %v162, 5
    %v164 = vand.u32 %v162, 31
    %v165 = vsub.s32 32, %v164
    %v166 = vshrl.u32 683565275, %v165
    %v167 = vshll.u32 683565275, %v164
    %v168 = vshrl.u32 2475754826, %v165
    %v169 = vor.u32 %v167, %v168
    %v170 = vshll.u32 2475754826, %v164
    %v171 = vshrl.u32 2131351028, %v165
    %v172 = vor.u32 %v170, %v171
    %v173 = vshll.u32 2131351028, %v164
    %v174 = vshrl.u32 2102212464, %v165
    %v175 = vor.u32 %v173, %v174
    %v176 = vshll.u32 2102212464, %v164
    %v177 = vshrl.u32 920167782, %v165
    %v178 = vor.u32 %v176, %v177
    %v179 = vshll.u32 920167782, %v164
    %v180 = vshrl.u32 1326507024, %v165
    %v181 = vor.u32 %v179, %v180
    %vm182 = vcmp.lt.s32.totalorder %v163, 1
    %vm183 = vcmp.lt.s32.totalorder %v163, 2
    %vm184 = vcmp.lt.s32.totalorder %v163, 3
    %vm185 = vcmp.lt.s32.totalorder %v163, 4
    %v186 = vsel %vm182, %v166, %v169
    %v187 = vsel %vm185, %v175, 2102212464
    %v188 = vsel %vm184, %v172, %v187
    %v189 = vsel %vm183, %v186, %v188
    %v190 = vsel %vm182, %v169, %v172
    %v191 = vsel %vm185, %v178, 920167782
    %v192 = vsel %vm184, %v175, %v191
    %v193 = vsel %vm183, %v190, %v192
    %v194 = vsel %vm182, %v172, %v175
    %v195 = vsel %vm185, %v181, 1326507024
    %v196 = vsel %vm184, %v178, %v195
    %v197 = vsel %vm183, %v194, %v196
    %v198 = vshll.u32 %v158, 8
    %v199 = vmul.u32.u64.compose %v198, %v197
    %v200 = vextract.low.u32 %v199
    %v201 = vextract.high.u32 %v199
    %v202 = vmul.u32.u64.compose %v198, %v193
    %v203 = vextract.low.u32 %v202
    %v204 = vextract.high.u32 %v202
    %v205 = vmul.u32 %v198, %v189
    %v206 = vadd.s32 %v201, %v203
    %vm207 = vc.u32 %v201, %v203
    %v208 = vadd.s32 %v204, 1
    %v209 = vsel %vm207, %v208, %v204
    %v210 = vadd.s32 %v205, %v209
    %v211 = vadd.s32 %v210, 536870912
    %v212 = vshrl.u32 %v211, 30
    %v213 = vshll.u32 %v212, 30
    %v214 = vsub.s32 %v210, %v213
    %vm215 = vcmp.lt.s32.totalorder %v214, 0
    %v216 = vsub.s32 0, %v214
    %v217 = vsel %vm215, %v216, %v214
    %v218 = vclz %v217
    %v219 = vsub.s32 %v218, 2
    %vm220 = vcmp.gt.s32.totalorder 0, %v219
    %v221 = vsel %vm220, 0, %v219
    %v222 = vsub.s32 32, %v221
    %v223 = vshll.u32 %v214, %v221
    %v224 = vshrl.u32 %v206, %v222
    %v225 = vor.u32 %v223, %v224
    %v226 = vsub.s32 4294967266, %v221
    %v227 = vadd.s32 %v226, 127
    %v228 = vshll.u32 %v227, 23
    %v229 = vor.u32 4788187, %v228
    %v230 = vand.u32 2147483647, %v229
    %v232 = vcvt.s32.f32 %v225
    %v233 = vmul.f32 %v232, %v230
    %v234 = vxor.u32 %v233, 2147483648
    %v235 = vsel %vm152, %v234, %v233
    %v236 = vsub.s32 4, %v212
    %v237 = vsel %vm152, %v236, %v212
    %v238 = vsel %vm151, %v46, %v235
    %v239 = vsel %vm151, 0, %v237
    %v240 = vcosq.f32.pop %v238
    %v241 = vsinq.f32.pop %v238
    %vm242 = vweird.f32 %v46
    %v243 = vand.u32 %v239, 3
    %vm244 = vcmp.lt.s32.totalorder %v243, 2
    %vm245 = vcmp.eq.s32.totalorder %v243, 0
    %v246 = vxor.u32 %v241, 2147483648
    %v247 = vsel %vm245, %v240, %v246
    %vm248 = vcmp.eq.s32.totalorder %v243, 2
    %v249 = vxor.u32 %v240, 2147483648
    %v250 = vsel %vm248, %v249, %v241
    %v251 = vsel %vm244, %v247, %v250
    %v252 = vsel %vm242, nan, %v251
    %v253 = vmul.f32 %v43, %v149
    %v254 = vmul.f32 %v44, %v252
    %vm255 = vcmask 130048
    %256 = vst.msk [vmem:[#allocation7] sm:$0xff] %vm255, %v253
    %257 = vst.msk [vmem:[#allocation7 + $0x8] sm:$0xff] %vm255, %v254
    %v258 = vand.u32 2147483647, %v45
    %vm259 = vcmp.le.f32.partialorder %v258, 0.7853982
    %vm260 = vcmp.lt.s32.totalorder %v45, 0
    %v261 = vand.u32 %v45, 2139095040
    %v262 = vshrl.u32 %v261, 23
    %v263 = vsub.s32 %v262, 127
    %v264 = vand.u32 2147483647, %v45
    %v265 = vand.u32 %v264, 8388607
    %v266 = vor.u32 %v265, 8388608
    %v267 = vsub.s32 0, %v266
    %v268 = vadd.s32 %v263, 1
    %vm269 = vcmp.gt.s32.totalorder %v268, 0
    %v270 = vsel %vm269, %v268, 0
    %v271 = vshrl.u32 %v270, 5
    %v272 = vand.u32 %v270, 31
    %v273 = vsub.s32 32, %v272
    %v274 = vshrl.u32 683565275, %v273
    %v275 = vshll.u32 683565275, %v272
    %v276 = vshrl.u32 2475754826, %v273
    %v277 = vor.u32 %v275, %v276
    %v278 = vshll.u32 2475754826, %v272
    %v279 = vshrl.u32 2131351028, %v273
    %v280 = vor.u32 %v278, %v279
    %v281 = vshll.u32 2131351028, %v272
    %v282 = vshrl.u32 2102212464, %v273
    %v283 = vor.u32 %v281, %v282
    %v284 = vshll.u32 2102212464, %v272
    %v285 = vshrl.u32 920167782, %v273
    %v286 = vor.u32 %v284, %v285
    %v287 = vshll.u32 920167782, %v272
    %v288 = vshrl.u32 1326507024, %v273
    %v289 = vor.u32 %v287, %v288
    %vm290 = vcmp.lt.s32.totalorder %v271, 1
    %vm291 = vcmp.lt.s32.totalorder %v271, 2
    %vm292 = vcmp.lt.s32.totalorder %v271, 3
    %vm293 = vcmp.lt.s32.totalorder %v271, 4
    %v294 = vsel %vm290, %v274, %v277
    %v295 = vsel %vm293, %v283, 2102212464
    %v296 = vsel %vm292, %v280, %v295
    %v297 = vsel %vm291, %v294, %v296
    %v298 = vsel %vm290, %v277, %v280
    %v299 = vsel %vm293, %v286, 920167782
    %v300 = vsel %vm292, %v283, %v299
    %v301 = vsel %vm291, %v298, %v300
    %v302 = vsel %vm290, %v280, %v283
    %v303 = vsel %vm293, %v289, 1326507024
    %v304 = vsel %vm292, %v286, %v303
    %v305 = vsel %vm291, %v302, %v304
    %v306 = vshll.u32 %v266, 8
    %v307 = vmul.u32.u64.compose %v306, %v305
    %v308 = vextract.low.u32 %v307
    %v309 = vextract.high.u32 %v307
    %v310 = vmul.u32.u64.compose %v306, %v301
    %v311 = vextract.low.u32 %v310
    %v312 = vextract.high.u32 %v310
    %v313 = vmul.u32 %v306, %v297
    %v314 = vadd.s32 %v309, %v311
    %vm315 = vc.u32 %v309, %v311
    %v316 = vadd.s32 %v312, 1
    %v317 = vsel %vm315, %v316, %v312
    %v318 = vadd.s32 %v313, %v317
    %v319 = vadd.s32 %v318, 536870912
    %v320 = vshrl.u32 %v319, 30
    %v321 = vshll.u32 %v320, 30
    %v322 = vsub.s32 %v318, %v321
    %vm323 = vcmp.lt.s32.totalorder %v322, 0
    %v324 = vsub.s32 0, %v322
    %v325 = vsel %vm323, %v324, %v322
    %v326 = vclz %v325
    %v327 = vsub.s32 %v326, 2
    %vm328 = vcmp.gt.s32.totalorder 0, %v327
    %v329 = vsel %vm328, 0, %v327
    %v330 = vsub.s32 32, %v329
    %v331 = vshll.u32 %v322, %v329
    %v332 = vshrl.u32 %v314, %v330
    %v333 = vor.u32 %v331, %v332
    %v334 = vsub.s32 4294967266, %v329
    %v335 = vadd.s32 %v334, 127
    %v336 = vshll.u32 %v335, 23
    %v337 = vor.u32 4788187, %v336
    %v338 = vand.u32 2147483647, %v337
    %v340 = vcvt.s32.f32 %v333
    %v341 = vmul.f32 %v340, %v338
    %v342 = vxor.u32 %v341, 2147483648
    %v343 = vsel %vm260, %v342, %v341
    %v344 = vsub.s32 4, %v320
    %v345 = vsel %vm260, %v344, %v320
    %v346 = vsel %vm259, %v45, %v343
    %v347 = vsel %vm259, 0, %v345
    %v348 = vcosq.f32.pop %v346
    %v349 = vsinq.f32.pop %v346
    %vm350 = vweird.f32 %v45
    %v351 = vadd.s32 %v347, 3
    %v352 = vand.u32 %v351, 3
    %vm353 = vcmp.lt.s32.totalorder %v352, 2
    %vm354 = vcmp.eq.s32.totalorder %v352, 0
    %v355 = vxor.u32 %v349, 2147483648
    %v356 = vsel %vm354, %v348, %v355
    %vm357 = vcmp.eq.s32.totalorder %v352, 2
    %v358 = vxor.u32 %v348, 2147483648
    %v359 = vsel %vm357, %v358, %v349
    %v360 = vsel %vm353, %v356, %v359
    %v361 = vsel %vm350, nan, %v360
    %v362 = vand.u32 2147483647, %v46
    %vm363 = vcmp.le.f32.partialorder %v362, 0.7853982
    %vm364 = vcmp.lt.s32.totalorder %v46, 0
    %v365 = vand.u32 %v46, 2139095040
    %v366 = vshrl.u32 %v365, 23
    %v367 = vsub.s32 %v366, 127
    %v368 = vand.u32 2147483647, %v46
    %v369 = vand.u32 %v368, 8388607
    %v370 = vor.u32 %v369, 8388608
    %v371 = vsub.s32 0, %v370
    %v372 = vadd.s32 %v367, 1
    %vm373 = vcmp.gt.s32.totalorder %v372, 0
    %v374 = vsel %vm373, %v372, 0
    %v375 = vshrl.u32 %v374, 5
    %v376 = vand.u32 %v374, 31
    %v377 = vsub.s32 32, %v376
    %v378 = vshrl.u32 683565275, %v377
    %v379 = vshll.u32 683565275, %v376
    %v380 = vshrl.u32 2475754826, %v377
    %v381 = vor.u32 %v379, %v380
    %v382 = vshll.u32 2475754826, %v376
    %v383 = vshrl.u32 2131351028, %v377
    %v384 = vor.u32 %v382, %v383
    %v385 = vshll.u32 2131351028, %v376
    %v386 = vshrl.u32 2102212464, %v377
    %v387 = vor.u32 %v385, %v386
    %v388 = vshll.u32 2102212464, %v376
    %v389 = vshrl.u32 920167782, %v377
    %v390 = vor.u32 %v388, %v389
    %v391 = vshll.u32 920167782, %v376
    %v392 = vshrl.u32 1326507024, %v377
    %v393 = vor.u32 %v391, %v392
    %vm394 = vcmp.lt.s32.totalorder %v375, 1
    %vm395 = vcmp.lt.s32.totalorder %v375, 2
    %vm396 = vcmp.lt.s32.totalorder %v375, 3
    %vm397 = vcmp.lt.s32.totalorder %v375, 4
    %v398 = vsel %vm394, %v378, %v381
    %v399 = vsel %vm397, %v387, 2102212464
    %v400 = vsel %vm396, %v384, %v399
    %v401 = vsel %vm395, %v398, %v400
    %v402 = vsel %vm394, %v381, %v384
    %v403 = vsel %vm397, %v390, 920167782
    %v404 = vsel %vm396, %v387, %v403
    %v405 = vsel %vm395, %v402, %v404
    %v406 = vsel %vm394, %v384, %v387
    %v407 = vsel %vm397, %v393, 1326507024
    %v408 = vsel %vm396, %v390, %v407
    %v409 = vsel %vm395, %v406, %v408
    %v410 = vshll.u32 %v370, 8
    %v411 = vmul.u32.u64.compose %v410, %v409
    %v412 = vextract.low.u32 %v411
    %v413 = vextract.high.u32 %v411
    %v414 = vmul.u32.u64.compose %v410, %v405
    %v415 = vextract.low.u32 %v414
    %v416 = vextract.high.u32 %v414
    %v417 = vmul.u32 %v410, %v401
    %v418 = vadd.s32 %v413, %v415
    %vm419 = vc.u32 %v413, %v415
    %v420 = vadd.s32 %v416, 1
    %v421 = vsel %vm419, %v420, %v416
    %v422 = vadd.s32 %v417, %v421
    %v423 = vadd.s32 %v422, 536870912
    %v424 = vshrl.u32 %v423, 30
    %v425 = vshll.u32 %v424, 30
    %v426 = vsub.s32 %v422, %v425
    %vm427 = vcmp.lt.s32.totalorder %v426, 0
    %v428 = vsub.s32 0, %v426
    %v429 = vsel %vm427, %v428, %v426
    %v430 = vclz %v429
    %v431 = vsub.s32 %v430, 2
    %vm432 = vcmp.gt.s32.totalorder 0, %v431
    %v433 = vsel %vm432, 0, %v431
    %v434 = vsub.s32 32, %v433
    %v435 = vshll.u32 %v426, %v433
    %v436 = vshrl.u32 %v418, %v434
    %v437 = vor.u32 %v435, %v436
    %v438 = vsub.s32 4294967266, %v433
    %v439 = vadd.s32 %v438, 127
    %v440 = vshll.u32 %v439, 23
    %v441 = vor.u32 4788187, %v440
    %v442 = vand.u32 2147483647, %v441
    %v444 = vcvt.s32.f32 %v437
    %v445 = vmul.f32 %v444, %v442
    %v446 = vxor.u32 %v445, 2147483648
    %v447 = vsel %vm364, %v446, %v445
    %v448 = vsub.s32 4, %v424
    %v449 = vsel %vm364, %v448, %v424
    %v450 = vsel %vm363, %v46, %v447
    %v451 = vsel %vm363, 0, %v449
    %v452 = vcosq.f32.pop %v450
    %v453 = vsinq.f32.pop %v450
    %vm454 = vweird.f32 %v46
    %v455 = vadd.s32 %v451, 3
    %v456 = vand.u32 %v455, 3
    %vm457 = vcmp.lt.s32.totalorder %v456, 2
    %vm458 = vcmp.eq.s32.totalorder %v456, 0
    %v459 = vxor.u32 %v453, 2147483648
    %v460 = vsel %vm458, %v452, %v459
    %vm461 = vcmp.eq.s32.totalorder %v456, 2
    %v462 = vxor.u32 %v452, 2147483648
    %v463 = vsel %vm461, %v462, %v453
    %v464 = vsel %vm457, %v460, %v463
    %v465 = vsel %vm454, nan, %v464
    %v466 = vmul.f32 %v43, %v361
    %v467 = vmul.f32 %v44, %v465
    %468 = vst.msk [vmem:[#allocation8] sm:$0xff] %vm255, %v466
    %469 = vst.msk [vmem:[#allocation8 + $0x8] sm:$0xff] %vm255, %v467
    // Predicated region
    $region18: #{tpu_custom_call.1} parent=1 // pred_check
      _
    $region19: #{tpu_custom_call.1} parent=1 // pred_check_branch
      %471 = sbr.rel (0) target = $region21
    $region20: #{tpu_custom_call.1} parent=1 // pred_region
      %s473 = ssub.s32 256, 256
      %474 = vsyncadd [#allocation4], %s473
      %s475 = sshll.u32 [#allocation7], 4
      %s476 = int_to_ptr.vmem [resolvable:$true] %s475
      %481 = dma.vmem_to_hbm [thread:$0]  %s476, 256, %s2, [#allocation4], 128, 128, 8
    $region21: #{tpu_custom_call.1} parent=1 // pred_fallthru
      _
    // Predicated region
    $region22: #{tpu_custom_call.1} parent=1 // pred_check
      _
    $region23: #{tpu_custom_call.1} parent=1 // pred_check_branch
      %483 = sbr.rel (0) target = $region25
    $region24: #{tpu_custom_call.1} parent=1 // pred_region
      %s485 = ssub.s32 256, 256
      %486 = vsyncadd [#allocation9], %s485
      %s487 = sshll.u32 [#allocation8], 4
      %s488 = int_to_ptr.vmem [resolvable:$true] %s487
      %493 = dma.vmem_to_hbm [thread:$0]  %s488, 256, %s3, [#allocation9], 128, 128, 8
    $region25: #{tpu_custom_call.1} parent=1 // pred_fallthru
      _
    // Predicated region
    $region26: #{tpu_custom_call.1} parent=1 // pred_check
      _
    $region27: #{tpu_custom_call.1} parent=1 // pred_check_branch
      %495 = sbr.rel (0) target = $region29
    $region28: #{tpu_custom_call.1} parent=1 // pred_region
      %496 = dma.done [#allocation4], 256
    $region29: #{tpu_custom_call.1} parent=1 // pred_fallthru
      _
    // Predicated region
    $region30: #{tpu_custom_call.1} parent=1 // pred_check
      _
    $region31: #{tpu_custom_call.1} parent=1 // pred_check_branch
      %498 = sbr.rel (0) target = $region33
    $region32: #{tpu_custom_call.1} parent=1 // pred_region
      %499 = dma.done [#allocation9], 256
    $region33: #{tpu_custom_call.1} parent=1 // pred_fallthru
      _
    %500 = vsyncpa [#allocation3], 1
    %501 = vsyncpa [#allocation6], 1
    %502 = vsyncpa [#allocation4], 1
    %503 = vsyncpa [#allocation9], 1

</llo_original>
